<compile_context>
chip_gen: v5e
topology: v5e:2x2
jax: 0.10.0
libtpu: 0.0.40
codegen_flags: <defaults>
</compile_context>

<pallas_src>
import functools
import math

import jax
import jax.numpy as jnp
from jax.experimental import pallas as pl
from jax.experimental.pallas import tpu as pltpu

_NEG = -1e30  # finite "-inf" for masked (padded) class columns; keep epilogue f32


def _round_up(v, m):
    return ((v + m - 1) // m) * m


def _ceil_div(a, b):
    return -(-a // b)


def _tpu_vmem_bytes():
    try:
        return int(pltpu.get_tpu_info().vmem_capacity_bytes)
    except Exception:
        return 64 * 1024 * 1024  # conservative default (v7x per-core VMEM)


def _pick_class_tile(c_valid, d, vmem_bytes):
    """Lane-dense class tile that (a) fits VMEM with headroom and (b) divides
    round_up(C, 128) as evenly as possible (minimal dead-column streaming)."""
    c128 = _round_up(c_valid, 128)
    cap = 2048 if vmem_bytes >= 100 * 1024 * 1024 else 1024  # v5e/v6e vs v7x
    tn_est = 512
    while cap > 128:
        w_bufs = 3 if d * cap * 2 <= (2 << 20) else 2
        est = (w_bufs * d * cap * 2        # streamed W tiles (bf16)
               + 2 * tn_est * d * 2        # resident x block (bf16, dbl-buffered)
               + 3 * tn_est * cap * 4)     # f32 score / select temporaries
        if est <= vmem_bytes // 2:
            break
        cap //= 2
    cap = max(cap, 128)
    n_ct = _ceil_div(c128, cap)
    tc = _round_up(_ceil_div(c128, n_ct), 128)
    return tc, tc * n_ct


def _cnn_softmax_kernel(x_ref, w_ref, y_ref, loss_ref, m_i, l_i, t_i,
                        *, c_valid, tile_c):
    ci = pl.program_id(1)

    @pl.when(ci == 0)
    def _init():
        m_i[...] = jnp.full_like(m_i, _NEG)   # running max
        l_i[...] = jnp.zeros_like(l_i)        # running sum(exp)
        t_i[...] = jnp.zeros_like(t_i)        # running target score

    # Single fused MXU matmul per class tile: scores = x @ (E + M @ corrT)[:, tile]
    # (bf16 inputs, f32 accumulation).
    scores = jnp.dot(x_ref[...], w_ref[...], preferred_element_type=jnp.float32)

    tn_, tc_ = scores.shape
    col_ids = jax.lax.broadcasted_iota(jnp.int32, (tn_, tc_), 1) + ci * tile_c

    if c_valid % tile_c != 0:
        # Padded lane columns exist only on the final class tile; mask them there
        # and leave every other tile untouched (saves a (tn, tc) compare+select
        # VPU pass per non-final tile).
        s = jax.lax.cond(
            ci == pl.num_programs(1) - 1,
            lambda sc, cid: jnp.where(cid < c_valid, sc, _NEG),
            lambda sc, cid: sc,
            scores, col_ids)
    else:
        s = scores

    # Online logsumexp over the class axis (f32).
    tile_max = jnp.max(s, axis=-1, keepdims=True)
    m_new = jnp.maximum(m_i[...], tile_max)
    alpha = jnp.exp(m_i[...] - m_new)
    l_i[...] = alpha * l_i[...] + jnp.sum(jnp.exp(s - m_new), axis=-1, keepdims=True)
    m_i[...] = m_new

    # Target score via fused select+reduce (no (N, C) one-hot). Valid targets
    # satisfy y < c_valid, where s == scores, so reusing the masked `s` keeps a
    # single (tn, tc) temporary live.
    t_i[...] += jnp.sum(jnp.where(col_ids == y_ref[...], s, 0.0),
                        axis=-1, keepdims=True)

    @pl.when(ci == pl.num_programs(1) - 1)
    def _finalize():
        # per-row CE loss: logsumexp - target_score
        loss_ref[...] = m_i[...] + jnp.log(l_i[...]) - t_i[...]


def cnn_softmax_prepare(embedding_matrix, M, corr_weight, samples):
    """Fold the correction path and pad/quantize the class weights ONCE.

    W = E + M @ corr(samples)^T is mathematically identical to the module's
    x@E + (x@M)@corrT; it is computed in f32 and quantized to bf16 a single
    time. Returns (w_padded_bf16, c_valid, tile_c); reuse across loss() calls
    (this hoists the full E read + cast out of the per-step wrapper).
    """
    corrT = jnp.take(corr_weight, samples, axis=0).T              # (R, C)
    w = embedding_matrix + jnp.dot(M, corrT)                      # (D, C) f32
    d, c_valid = w.shape
    tc, c_pad = _pick_class_tile(int(c_valid), int(d), _tpu_vmem_bytes())
    w_p = jnp.zeros((d, c_pad), jnp.bfloat16).at[:, :c_valid].set(
        w.astype(jnp.bfloat16))
    return w_p, int(c_valid), int(tc)


def _class_weight_spec(d, tc, deep):
    idx = lambda i, c: (0, c)
    if deep:
        try:
            # Small W tiles: 3-deep buffering hides per-step DMA issue latency.
            return pl.BlockSpec((d, tc), idx, pipeline_mode=pl.Buffered(3))
        except TypeError:   # pipeline_mode unavailable -> default double buffer
            pass
    return pl.BlockSpec((d, tc), idx)


def cnn_softmax_loss(x, y, w_padded, *, c_valid, tc, force_kernel=False):
    """Summed (size_average=False) cross-entropy of x @ (E + M@corrT) vs y."""
    n, d = x.shape
    c_pad = w_padded.shape[1]
    assert c_pad % tc == 0

    # Tiny shapes: lane padding (C -> 128) and fixed pallas_call overhead
    # dominate; a fused XLA expression is faster.
    if not force_kernel and (c_valid < 128 or n < 64):
        scores = jnp.dot(x.astype(jnp.bfloat16), w_padded[:, :c_valid],
                         preferred_element_type=jnp.float32)
        tgt = jnp.take_along_axis(scores, y.astype(jnp.int32)[:, None], axis=1)[:, 0]
        return jnp.sum(jax.nn.logsumexp(scores, axis=-1) - tgt)

    # Row tile: large (total W HBM traffic = (N/tn)*D*C*2B, so bigger tn cuts
    # re-streaming), multiple of 16 for bf16 sublanes, but split so the
    # "parallel" N axis has >= 2 blocks to feed both TensorCores on v7x.
    n16 = _round_up(n, 16)
    tn = min(512, n16)
    if n16 // tn < 2 and n16 >= 32:
        tn = _round_up(_ceil_div(n16, 2), 16)
    n_pad = _round_up(n16, tn)

    bf = jnp.bfloat16
    x_p = jnp.zeros((n_pad, d), bf).at[:n, :].set(x.astype(bf))
    y_p = jnp.zeros((n_pad, 1), jnp.int32).at[:n, 0].set(y.astype(jnp.int32))

    n_ct = c_pad // tc
    grid = (n_pad // tn, n_ct)
    kernel = functools.partial(_cnn_softmax_kernel, c_valid=c_valid, tile_c=tc)
    deep_w = (n_ct > 1) and (d * tc * 2 <= (2 << 20))
    vmem = _tpu_vmem_bytes()

    per_row = pl.pallas_call(
        kernel,
        out_shape=jax.ShapeDtypeStruct((n_pad, 1), jnp.float32),
        grid_spec=pltpu.PrefetchScalarGridSpec(
            num_scalar_prefetch=0,
            grid=grid,
            in_specs=[
                pl.BlockSpec((tn, d), lambda i, c: (i, 0)),     # x (resident over C)
                _class_weight_spec(d, tc, deep_w),              # W streamed over C
                pl.BlockSpec((tn, 1), lambda i, c: (i, 0)),     # y targets
            ],
            out_specs=pl.BlockSpec((tn, 1), lambda i, c: (i, 0)),  # per-row loss
            scratch_shapes=[
                pltpu.VMEM((tn, 1), jnp.float32),   # running max
                pltpu.VMEM((tn, 1), jnp.float32),   # running sum(exp)
                pltpu.VMEM((tn, 1), jnp.float32),   # running target score
            ],
        ),
        compiler_params=pltpu.CompilerParams(
            dimension_semantics=("parallel", "arbitrary"),
            vmem_limit_bytes=min(vmem * 3 // 4, 100 * 1024 * 1024),
        ),
    )(x_p, w_padded, y_p)

    # Padded rows sliced off; summed (size_average=False) cross-entropy.
    return jnp.sum(per_row[:n, 0])


if __name__ == "__main__":
    # Small shapes consistent with the module's __init__ / forward.
    N = 16           # batch of (flattened) token positions
    output_dim = 32  # encoder output dim D
    corr_dim = 16    # correction dim R
    n_class = 64     # vocab size for the corr embedding table
    n_samples = 7    # negative samples -> C = n_samples + 1 columns (col 0 = oov)
    C = n_samples + 1

    key = jax.random.PRNGKey(0)
    k_m, k_corr, k_oov, k_sub, k_x, k_y, k_samp = jax.random.split(key, 7)

    stdv = 1.0 / math.sqrt(corr_dim)
    M = jax.random.uniform(k_m, (output_dim, corr_dim), jnp.float32, -stdv, stdv)
    corr_weight = jax.random.uniform(k_corr, (n_class, corr_dim), jnp.float32, -0.25, 0.25)
    oov_column = jax.random.uniform(k_oov, (output_dim, 1), jnp.float32, -0.25, 0.25)

    # update_embedding_matrix(): oov_column concatenated with token_embedder outputs.
    # TODO(synk): token_embedder is an external module; stand in deterministic values.
    sub_cols = jax.random.uniform(k_sub, (output_dim, n_samples), jnp.float32, -0.5, 0.5)
    embedding_matrix = jnp.concatenate([oov_column, sub_cols], axis=1)  # (D, C)

    samples = jnp.concatenate(
        [jnp.zeros((1,), jnp.int32),
         jax.random.randint(k_samp, (n_samples,), 1, n_class, jnp.int32)])

    x = jax.random.normal(k_x, (N, output_dim), jnp.float32)
    y = jax.random.randint(k_y, (N,), 0, C, jnp.int32)  # already column-mapped targets

    # Prepare once (fold + pad + bf16 cast), reuse for every loss() call.
    w_p, c_valid, tc = cnn_softmax_prepare(embedding_matrix, M, corr_weight, samples)

    loss_fn = jax.jit(functools.partial(
        cnn_softmax_loss, c_valid=c_valid, tc=tc, force_kernel=True))
    loss = jax.block_until_ready(loss_fn(x, y, w_p))

    # Reference with the same bf16 quantization of the folded W (f32 acc/epilogue).
    w_ref = embedding_matrix + jnp.dot(M, jnp.take(corr_weight, samples, axis=0).T)
    scores_bf = jnp.dot(x.astype(jnp.bfloat16), w_ref.astype(jnp.bfloat16),
                        preferred_element_type=jnp.float32)
    loss_bf = jnp.sum(jax.nn.logsumexp(scores_bf, axis=-1)
                      - scores_bf[jnp.arange(N), y])
    assert jnp.allclose(loss, loss_bf, rtol=1e-3, atol=1e-3), (loss, loss_bf)

    # Loose check against the full-f32 module semantics (bf16 quantization of
    # x / W is the only deviation from the PyTorch forward).
    scores_f32 = (jnp.dot(x, embedding_matrix)
                  + jnp.dot(jnp.dot(x, M),
                            jnp.take(corr_weight, samples, axis=0).T))
    loss_f32 = jnp.sum(jax.nn.logsumexp(scores_f32, axis=-1)
                       - scores_f32[jnp.arange(N), y])
    assert jnp.allclose(loss, loss_f32, rtol=5e-2, atol=5e-1), (loss, loss_f32)

    print("KERNEL_OK")
</pallas_src>

<mosaic_0001>
module attributes {stable_mosaic.version = 11 : i64} {
  func.func @_cnn_softmax_kernel(%arg0: i32, %arg1: i32, %arg2: memref<16x32xbf16, #tpu.memory_space<vmem>>, %arg3: memref<32x128xbf16, #tpu.memory_space<vmem>>, %arg4: memref<16x1xi32, #tpu.memory_space<vmem>>, %arg5: memref<16x1xf32, #tpu.memory_space<vmem>>, %arg6: memref<16x1xf32, #tpu.memory_space<vmem>>, %arg7: memref<16x1xf32, #tpu.memory_space<vmem>>, %arg8: memref<16x1xf32, #tpu.memory_space<vmem>>) attributes {dimension_semantics = [#tpu.dimension_semantics<parallel>, #tpu.dimension_semantics<arbitrary>], iteration_bounds = array<i64: 1, 1>, scalar_prefetch = 0 : i64, scratch_operands = 3 : i64, tpu.core_type = #tpu.core_type<tc>, window_params = [{transform_indices = @transform_0, window_bounds = array<i64: 16, 32>}, {transform_indices = @transform_1, window_bounds = array<i64: 32, 128>}, {transform_indices = @transform_2, window_bounds = array<i64: 16, 1>}, {transform_indices = @transform_3, window_bounds = array<i64: 16, 1>}]} {
    %c0_i32 = arith.constant 0 : i32
    %0 = arith.cmpi eq, %arg1, %c0_i32 : i32
    %1 = arith.extui %0 : i1 to i32
    %c0_i32_0 = arith.constant 0 : i32
    %2 = arith.cmpi ne, %1, %c0_i32_0 : i32
    scf.if %2 {
      %cst_28 = arith.constant -1.000000e+30 : f32
      %44 = vector.broadcast %cst_28 : f32 to vector<16x1xf32>
      %c0_29 = arith.constant 0 : index
      %c0_30 = arith.constant 0 : index
      %45 = vector.load %arg6[%c0_29, %c0_30] : memref<16x1xf32, #tpu.memory_space<vmem>>, vector<16x1xf32>
      tpu.vector_store %arg6[%c0_29, %c0_30], %44 {strides = array<i32>} : memref<16x1xf32, #tpu.memory_space<vmem>>, vector<16x1xf32>,
      %cst_31 = arith.constant 0.000000e+00 : f32
      %46 = vector.broadcast %cst_31 : f32 to vector<16x1xf32>
      %c0_32 = arith.constant 0 : index
      %c0_33 = arith.constant 0 : index
      %47 = vector.load %arg7[%c0_32, %c0_33] : memref<16x1xf32, #tpu.memory_space<vmem>>, vector<16x1xf32>
      tpu.vector_store %arg7[%c0_32, %c0_33], %46 {strides = array<i32>} : memref<16x1xf32, #tpu.memory_space<vmem>>, vector<16x1xf32>,
      %cst_34 = arith.constant 0.000000e+00 : f32
      %48 = vector.broadcast %cst_34 : f32 to vector<16x1xf32>
      %c0_35 = arith.constant 0 : index
      %c0_36 = arith.constant 0 : index
      %49 = vector.load %arg8[%c0_35, %c0_36] : memref<16x1xf32, #tpu.memory_space<vmem>>, vector<16x1xf32>
      tpu.vector_store %arg8[%c0_35, %c0_36], %48 {strides = array<i32>} : memref<16x1xf32, #tpu.memory_space<vmem>>, vector<16x1xf32>,
    } else {
    }
    %c0 = arith.constant 0 : index
    %c0_1 = arith.constant 0 : index
    %3 = vector.load %arg2[%c0, %c0_1] : memref<16x32xbf16, #tpu.memory_space<vmem>>, vector<16x32xbf16>
    %c0_2 = arith.constant 0 : index
    %c0_3 = arith.constant 0 : index
    %4 = vector.load %arg3[%c0_2, %c0_3] : memref<32x128xbf16, #tpu.memory_space<vmem>>, vector<32x128xbf16>
    %cst = arith.constant dense<0.000000e+00> : vector<16x128xf32>
    %5 = tpu.matmul %3, %4, %cst {dimension_numbers = #tpu.dot_dimension_numbers<[1], [0], [0], [1], [0, 0, 1, 1], [], []>} : vector<16x32xbf16>, vector<32x128xbf16>, vector<16x128xf32> -> vector<16x128xf32>
    %6 = tpu.iota {dimensions = array<i32: 1>} : vector<16x128xi32>
    %c128_i32 = arith.constant 128 : i32
    %7 = arith.muli %arg1, %c128_i32 : i32
    %8 = vector.broadcast %7 : i32 to vector<16x128xi32>
    %9 = arith.addi %6, %8 : vector<16x128xi32>
    %c0_i32_4 = arith.constant 0 : i32
    %10 = arith.cmpi eq, %arg1, %c0_i32_4 : i32
    %11 = arith.extui %10 : i1 to i32
    %c0_i32_5 = arith.constant 0 : i32
    %12 = arith.cmpi ne, %11, %c0_i32_5 : i32
    %13 = scf.if %12 -> (vector<16x128xf32>) {
      %c8_i32 = arith.constant 8 : i32
      %44 = vector.broadcast %c8_i32 : i32 to vector<16x128xi32>
      %45 = arith.cmpi slt, %9, %44 : vector<16x128xi32>
      %cst_28 = arith.constant -1.000000e+30 : f32
      %46 = vector.broadcast %cst_28 : f32 to vector<16x128xf32>
      %47 = arith.select %45, %5, %46 : vector<16x128xi1>, vector<16x128xf32>
      scf.yield %47 : vector<16x128xf32>
    } else {
      scf.yield %5 : vector<16x128xf32>
    }
    %cst_6 = arith.constant dense<0xFF800000> : vector<16xf32>
    %14 = vector.multi_reduction <maximumf>, %13, %cst_6 [1] : vector<16x128xf32> to vector<16xf32>
    %15 = vector.shape_cast %14 : vector<16xf32> to vector<16x1xf32>
    %c0_7 = arith.constant 0 : index
    %c0_8 = arith.constant 0 : index
    %16 = vector.load %arg6[%c0_7, %c0_8] : memref<16x1xf32, #tpu.memory_space<vmem>>, vector<16x1xf32>
    %17 = arith.maximumf %16, %15 : vector<16x1xf32>
    %c0_9 = arith.constant 0 : index
    %c0_10 = arith.constant 0 : index
    %18 = vector.load %arg6[%c0_9, %c0_10] : memref<16x1xf32, #tpu.memory_space<vmem>>, vector<16x1xf32>
    %19 = arith.subf %18, %17 : vector<16x1xf32>
    %20 = math.exp %19 : vector<16x1xf32>
    %c0_11 = arith.constant 0 : index
    %c0_12 = arith.constant 0 : index
    %21 = vector.load %arg7[%c0_11, %c0_12] : memref<16x1xf32, #tpu.memory_space<vmem>>, vector<16x1xf32>
    %22 = arith.mulf %20, %21 : vector<16x1xf32>
    %23 = vector.broadcast %17 : vector<16x1xf32> to vector<16x128xf32>
    %24 = arith.subf %13, %23 : vector<16x128xf32>
    %25 = math.exp %24 : vector<16x128xf32>
    %cst_13 = arith.constant dense<0.000000e+00> : vector<16xf32>
    %26 = vector.multi_reduction <add>, %25, %cst_13 [1] : vector<16x128xf32> to vector<16xf32>
    %27 = vector.shape_cast %26 : vector<16xf32> to vector<16x1xf32>
    %28 = arith.addf %22, %27 : vector<16x1xf32>
    %c0_14 = arith.constant 0 : index
    %c0_15 = arith.constant 0 : index
    %29 = vector.load %arg7[%c0_14, %c0_15] : memref<16x1xf32, #tpu.memory_space<vmem>>, vector<16x1xf32>
    tpu.vector_store %arg7[%c0_14, %c0_15], %28 {strides = array<i32>} : memref<16x1xf32, #tpu.memory_space<vmem>>, vector<16x1xf32>,
    %c0_16 = arith.constant 0 : index
    %c0_17 = arith.constant 0 : index
    %30 = vector.load %arg6[%c0_16, %c0_17] : memref<16x1xf32, #tpu.memory_space<vmem>>, vector<16x1xf32>
    tpu.vector_store %arg6[%c0_16, %c0_17], %17 {strides = array<i32>} : memref<16x1xf32, #tpu.memory_space<vmem>>, vector<16x1xf32>,
    %c0_18 = arith.constant 0 : index
    %c0_19 = arith.constant 0 : index
    %31 = vector.load %arg8[%c0_18, %c0_19] : memref<16x1xf32, #tpu.memory_space<vmem>>, vector<16x1xf32>
    %c0_20 = arith.constant 0 : index
    %c0_21 = arith.constant 0 : index
    %32 = vector.load %arg4[%c0_20, %c0_21] : memref<16x1xi32, #tpu.memory_space<vmem>>, vector<16x1xi32>
    %33 = vector.broadcast %32 : vector<16x1xi32> to vector<16x128xi32>
    %34 = arith.cmpi eq, %9, %33 : vector<16x128xi32>
    %cst_22 = arith.constant 0.000000e+00 : f32
    %35 = vector.broadcast %cst_22 : f32 to vector<16x128xf32>
    %36 = arith.select %34, %13, %35 : vector<16x128xi1>, vector<16x128xf32>
    %cst_23 = arith.constant dense<0.000000e+00> : vector<16xf32>
    %37 = vector.multi_reduction <add>, %36, %cst_23 [1] : vector<16x128xf32> to vector<16xf32>
    %38 = vector.shape_cast %37 : vector<16xf32> to vector<16x1xf32>
    %39 = arith.addf %31, %38 : vector<16x1xf32>
    %c0_24 = arith.constant 0 : index
    %c0_25 = arith.constant 0 : index
    %40 = vector.load %arg8[%c0_24, %c0_25] : memref<16x1xf32, #tpu.memory_space<vmem>>, vector<16x1xf32>
    tpu.vector_store %arg8[%c0_24, %c0_25], %39 {strides = array<i32>} : memref<16x1xf32, #tpu.memory_space<vmem>>, vector<16x1xf32>,
    %c0_i32_26 = arith.constant 0 : i32
    %41 = arith.cmpi eq, %arg1, %c0_i32_26 : i32
    %42 = arith.extui %41 : i1 to i32
    %c0_i32_27 = arith.constant 0 : i32
    %43 = arith.cmpi ne, %42, %c0_i32_27 : i32
    scf.if %43 {
      %c0_28 = arith.constant 0 : index
      %c0_29 = arith.constant 0 : index
      %44 = vector.load %arg6[%c0_28, %c0_29] : memref<16x1xf32, #tpu.memory_space<vmem>>, vector<16x1xf32>
      %c0_30 = arith.constant 0 : index
      %c0_31 = arith.constant 0 : index
      %45 = vector.load %arg7[%c0_30, %c0_31] : memref<16x1xf32, #tpu.memory_space<vmem>>, vector<16x1xf32>
      %46 = math.log %45 : vector<16x1xf32>
      %47 = arith.addf %44, %46 : vector<16x1xf32>
      %c0_32 = arith.constant 0 : index
      %c0_33 = arith.constant 0 : index
      %48 = vector.load %arg8[%c0_32, %c0_33] : memref<16x1xf32, #tpu.memory_space<vmem>>, vector<16x1xf32>
      %49 = arith.subf %47, %48 : vector<16x1xf32>
      %c0_34 = arith.constant 0 : index
      %c0_35 = arith.constant 0 : index
      %50 = vector.load %arg5[%c0_34, %c0_35] : memref<16x1xf32, #tpu.memory_space<vmem>>, vector<16x1xf32>
      tpu.vector_store %arg5[%c0_34, %c0_35], %49 {strides = array<i32>} : memref<16x1xf32, #tpu.memory_space<vmem>>, vector<16x1xf32>,
    } else {
    }
    return
  }
  func.func @transform_0(%arg0: i32, %arg1: i32) -> (i32, i32) {
    %c0_i32 = arith.constant 0 : i32
    %c0_i32_0 = arith.constant 0 : i32
    return %arg0, %c0_i32 : i32, i32
  }
  func.func @transform_1(%arg0: i32, %arg1: i32) -> (i32, i32) {
    %c0_i32 = arith.constant 0 : i32
    %c0_i32_0 = arith.constant 0 : i32
    return %c0_i32, %arg1 : i32, i32
  }
  func.func @transform_2(%arg0: i32, %arg1: i32) -> (i32, i32) {
    %c0_i32 = arith.constant 0 : i32
    %c0_i32_0 = arith.constant 0 : i32
    return %arg0, %c0_i32 : i32, i32
  }
  func.func @transform_3(%arg0: i32, %arg1: i32) -> (i32, i32) {
    %c0_i32 = arith.constant 0 : i32
    %c0_i32_0 = arith.constant 0 : i32
    return %arg0, %c0_i32 : i32, i32
  }
}

</mosaic_0001>

<llo_original>
// kernel: cnn_softmax_loss.1
$region0: #{cnn_softmax_loss.1}
  #allocation0 [shape = 'u32[]', space=smem, size = 0x4, offset = 0x4, fixed_abs, tag = 'smem constant byte address 0x4 - core index']
  #allocation1 [shape = 'u32[72,128]{1,0:T(1,128)}', space=vmem, size = 0x9000, scoped, tag = 'internal scratch']
  #allocation2 [shape = 'f32[16,1]{1,0:T(8,128)}', space=vmem, size = 0x2000, scoped, tag = 'scratch operand']
  #allocation3 [shape = 'f32[16,1]{1,0:T(8,128)}', space=vmem, size = 0x2000, scoped, tag = 'scratch operand']
  #allocation4 [shape = 'f32[16,1]{1,0:T(8,128)}', space=vmem, size = 0x2000, scoped, tag = 'scratch operand']
  %s0 = inlined_call_operand.vmem [shape: bf16[16,32], index: 0, kind: input, shape index: {}]
  %s1 = inlined_call_operand.vmem [shape: bf16[32,128], index: 1, kind: input, shape index: {}]
  %s2 = inlined_call_operand.vmem [shape: s32[16,1], index: 2, kind: input, shape index: {}]
  %s3 = inlined_call_operand.vmem [shape: f32[16,1], index: 3, kind: output, shape index: {}]
  %s4 = sld [smem:[#allocation0]]
  $region38: #{cnn_softmax_loss.1} parent=0
    _
  %s6 = ssub.s32 1, %s4
  %s7 = scalar_select 0, %s6, %s4
  // Predicated region
  $region2: #{cnn_softmax_loss.1} parent=0 // pred_check
    _
  $region3: #{cnn_softmax_loss.1} parent=0 // pred_check_branch
    %9 = sbr.rel (0) target = $region5
  $region4: #{cnn_softmax_loss.1} parent=0 // pred_region
    _
  $region5: #{cnn_softmax_loss.1} parent=0 // pred_fallthru
    _
  // Predicated region
  $region6: #{cnn_softmax_loss.1} parent=0 // pred_check
    _
  $region7: #{cnn_softmax_loss.1} parent=0 // pred_check_branch
    %11 = sbr.rel (0) target = $region9
  $region8: #{cnn_softmax_loss.1} parent=0 // pred_region
    _
  $region9: #{cnn_softmax_loss.1} parent=0 // pred_fallthru
    _
  // Predicated region
  $region10: #{cnn_softmax_loss.1} parent=0 // pred_check
    _
  $region11: #{cnn_softmax_loss.1} parent=0 // pred_check_branch
    %13 = sbr.rel (0) target = $region13
  $region12: #{cnn_softmax_loss.1} parent=0 // pred_region
    _
  $region13: #{cnn_softmax_loss.1} parent=0 // pred_fallthru
    _
  %p15 = scmp.eq.s32.totalorder 0, 0
  // Predicated region
  $region14: #{cnn_softmax_loss.1} parent=0 // pred_check
    %p16 = pneg %p15
  $region15: #{cnn_softmax_loss.1} parent=0 // pred_check_branch
    %18 = sbr.rel (%p16) target = $region17
  $region16: #{cnn_softmax_loss.1} parent=0 // pred_region
    %vm19 = vcmask 7168
    %20 = vst.msk [vmem:[#allocation2] sm:$0xff] %vm19, -1e+30
    %21 = vst.msk [vmem:[#allocation2 + $0x8] sm:$0xff] %vm19, -1e+30
    %22 = vst.msk [vmem:[#allocation3] sm:$0xff] %vm19, 0.0
    %23 = vst.msk [vmem:[#allocation3 + $0x8] sm:$0xff] %vm19, 0.0
    %24 = vst.msk [vmem:[#allocation4] sm:$0xff] %vm19, 0.0
    %25 = vst.msk [vmem:[#allocation4 + $0x8] sm:$0xff] %vm19, 0.0
  $region17: #{cnn_softmax_loss.1} parent=0 // pred_fallthru
    _
  %v26 = vld [vmem:[%s0] sm:$0xf]
  %v27 = vld [vmem:[%s0 + $0x4] sm:$0xf]
  %v28 = vld [vmem:[%s1] sm:$0xf]
  %v29 = vld [vmem:[%s1 + $0x4] sm:$0xf]
  %v30 = vld [vmem:[%s1 + $0x8] sm:$0xf]
  %v31 = vld [vmem:[%s1 + $0xc] sm:$0xf]
  %v34 = vunpack.c.l.b16 %v26
  %v35 = vunpack.c.l.b16 %v27
  %v36 = vpack.c.b16 %v35, %v34
  %v41 = vunpack.c.l.b16 %v28
  %v42 = vunpack.c.l.b16 %v29
  %v43 = vunpack.c.l.b16 %v30
  %v44 = vunpack.c.l.b16 %v31
  %v45 = vpack.c.b16 %v42, %v41
  %v46 = vpack.c.b16 %v44, %v43
  %vm49 = vcmask 261120
  %v51 = vsel %vm49, %v36, 0
  %53 = vmatpush.bf16.msra.mxu0 0
  %54 = vmatpush.bf16.msra.mxu0 0
  %55 = vmatpush.bf16.msra.mxu0 0
  %56 = vmatpush.bf16.msra.mxu0 0
  %57 = vmatpush.bf16.msra.mxu0 0
  %58 = vmatpush.bf16.msra.mxu0 0
  %59 = vmatpush.bf16.msra.mxu0 %v46
  %60 = vmatpush.bf16.msra.mxu0 %v45
  %61 = vmatmul.bf16.gmra.mxu0 %v51
  %v62 = vpop.f32.mrf.mxu0
  %v63 = vadd.f32 0.0, %v62
  %v64 = vpop.f32.mrf.mxu0
  %v65 = vadd.f32 0.0, %v64
  %66 = vdwg.mxu0
  %v67 = vlaneseq
  %v68 = vand.u32 %v67, 127
  %s69 = smul.u32 0, 128
  %v70 = vstv %s69
  %v71 = vadd.s32 %v68, %v70
  // Predicated region
  $region18: #{cnn_softmax_loss.1} parent=0 // pred_check
    %p72 = pneg %p15
  $region19: #{cnn_softmax_loss.1} parent=0 // pred_check_branch
    %74 = sbr.rel (%p72) target = $region21
  $region20: #{cnn_softmax_loss.1} parent=0 // pred_region
    %vm75 = vcmp.lt.s32.totalorder %v71, 8
    %v76 = vsel %vm75, %v63, -1e+30
    %v77 = vsel %vm75, %v65, -1e+30
  $region21: #{cnn_softmax_loss.1} parent=0 // pred_fallthru
    %v78 = vphi 0, %v76
    %v79 = vphi 0, %v77
  %p80 = pneg %p15
  // Predicated region
  $region22: #{cnn_softmax_loss.1} parent=0 // pred_check
    _
  $region23: #{cnn_softmax_loss.1} parent=0 // pred_check_branch
    %82 = sbr.rel (%p15) target = $region25
  $region24: #{cnn_softmax_loss.1} parent=0 // pred_region
    _
  $region25: #{cnn_softmax_loss.1} parent=0 // pred_fallthru
    %v83 = vphi %v78, %v63
    %v84 = vphi %v79, %v65
  %85 = vmax.xlane.f32.xlu0 %v83
  %v86 = vpop.xlane.xlu0 %85
  %87 = vmax.xlane.f32.xlu0 %v84
  %v88 = vpop.xlane.xlu0 %87
  %v89 = vld [vmem:[#allocation2] sm:$0xff]
  %v90 = vld [vmem:[#allocation2 + $0x8] sm:$0xff]
  %v91 = vmax.f32 %v89, %v86
  %v92 = vmax.f32 %v90, %v88
  %v93 = vsub.f32 %v89, %v91
  %v94 = vsub.f32 %v90, %v92
  %v95 = vmul.f32 %v93, 1.442695
  %v96 = vpow.pop %v95
  %v97 = vmul.f32 %v94, 1.442695
  %v98 = vpow.pop %v97
  %v99 = vld [vmem:[#allocation3] sm:$0xff]
  %v100 = vld [vmem:[#allocation3 + $0x8] sm:$0xff]
  %v101 = vmul.f32 %v96, %v99
  %v102 = vmul.f32 %v98, %v100
  %104 = vset.pattern.permute.xlu0 0
  %105 = vperm.xlu0 %104, %v91
  %v106 = vpop.permute.xlu0 %105
  %109 = vset.pattern.permute.xlu0 0
  %110 = vperm.xlu0 %109, %v92
  %v111 = vpop.permute.xlu0 %110
  %v113 = vsub.f32 %v83, %v106
  %v114 = vsub.f32 %v84, %v111
  %v115 = vmul.f32 %v113, 1.442695
  %v116 = vpow.pop %v115
  %v117 = vmul.f32 %v114, 1.442695
  %v118 = vpow.pop %v117
  %119 = vadd.xlane.f32.xlu0 %v116
  %v120 = vpop.xlane.xlu0 %119
  %121 = vadd.xlane.f32.xlu0 %v118
  %v122 = vpop.xlane.xlu0 %121
  %v123 = vadd.f32 %v101, %v120
  %v124 = vadd.f32 %v102, %v122
  %vm125 = vcmask 7168
  %126 = vst.msk [vmem:[#allocation3] sm:$0xff] %vm125, %v123
  %127 = vst.msk [vmem:[#allocation3 + $0x8] sm:$0xff] %vm125, %v124
  %128 = vst.msk [vmem:[#allocation2] sm:$0xff] %vm125, %v91
  %129 = vst.msk [vmem:[#allocation2 + $0x8] sm:$0xff] %vm125, %v92
  %v130 = vld [vmem:[#allocation4] sm:$0xff]
  %v131 = vld [vmem:[#allocation4 + $0x8] sm:$0xff]
  %v132 = vld [vmem:[%s2] sm:$0xff]
  %v133 = vld [vmem:[%s2 + $0x8] sm:$0xff]
  %134 = vset.pattern.permute.xlu0 0
  %135 = vperm.xlu0 %134, %v132
  %v136 = vpop.permute.xlu0 %135
  %137 = vset.pattern.permute.xlu0 0
  %138 = vperm.xlu0 %137, %v133
  %v139 = vpop.permute.xlu0 %138
  %vm140 = vcmp.eq.s32.totalorder %v71, %v136
  %vm141 = vcmp.eq.s32.totalorder %v71, %v139
  %v142 = vsel %vm140, %v83, 0.0
  %v143 = vsel %vm141, %v84, 0.0
  %144 = vadd.xlane.f32.xlu0 %v142
  %v145 = vpop.xlane.xlu0 %144
  %146 = vadd.xlane.f32.xlu0 %v143
  %v147 = vpop.xlane.xlu0 %146
  %v148 = vadd.f32 %v130, %v145
  %v149 = vadd.f32 %v131, %v147
  %150 = vst.msk [vmem:[#allocation4] sm:$0xff] %vm125, %v148
  %151 = vst.msk [vmem:[#allocation4 + $0x8] sm:$0xff] %vm125, %v149
  // Predicated region
  $region26: #{cnn_softmax_loss.1} parent=0 // pred_check
    %p152 = pneg %p15
  $region27: #{cnn_softmax_loss.1} parent=0 // pred_check_branch
    %154 = sbr.rel (%p152) target = $region29
  $region28: #{cnn_softmax_loss.1} parent=0 // pred_region
    %v155 = vld [vmem:[#allocation2] sm:$0xff]
    %v156 = vld [vmem:[#allocation2 + $0x8] sm:$0xff]
    %v157 = vld [vmem:[#allocation3] sm:$0xff]
    %v158 = vld [vmem:[#allocation3 + $0x8] sm:$0xff]
    %v159 = vlog2.pop %v157
    %v160 = vmul.f32 %v159, 0.6931472
    %v161 = vlog2.pop %v158
    %v162 = vmul.f32 %v161, 0.6931472
    %v163 = vadd.f32 %v155, %v160
    %v164 = vadd.f32 %v156, %v162
    %v165 = vld [vmem:[#allocation4] sm:$0xff]
    %v166 = vld [vmem:[#allocation4 + $0x8] sm:$0xff]
    %v167 = vsub.f32 %v163, %v165
    %v168 = vsub.f32 %v164, %v166
    %169 = vst.msk [vmem:[%s3] sm:$0xff] %vm125, %v167
    %170 = vst.msk [vmem:[%s3 + $0x8] sm:$0xff] %vm125, %v168
  $region29: #{cnn_softmax_loss.1} parent=0 // pred_fallthru
    _
  // Predicated region
  $region30: #{cnn_softmax_loss.1} parent=0 // pred_check
    _
  $region31: #{cnn_softmax_loss.1} parent=0 // pred_check_branch
    %172 = sbr.rel (0) target = $region33
  $region32: #{cnn_softmax_loss.1} parent=0 // pred_region
    _
  $region33: #{cnn_softmax_loss.1} parent=0 // pred_fallthru
    _
  // Predicated region
  $region34: #{cnn_softmax_loss.1} parent=0 // pred_check
    _
  $region35: #{cnn_softmax_loss.1} parent=0 // pred_check_branch
    %174 = sbr.rel (0) target = $region37
  $region36: #{cnn_softmax_loss.1} parent=0 // pred_region
    _
  $region37: #{cnn_softmax_loss.1} parent=0 // pred_fallthru
    _

</llo_original>
